<compile_context>
chip_gen: v7x
topology: tpu7x:2x2x1
jax: 0.10.0
libtpu: 0.0.40
codegen_flags: <defaults>
</compile_context>

<pallas_src>
import jax
import jax.numpy as jnp
from jax.experimental import pallas as pl
from jax.experimental.pallas import tpu as pltpu

HIDDEN = 256


def _round_up(x, m):
    return (x + m - 1) // m * m


def valuenet_kernel(x_ref, w1_ref, b1_ref, w2_ref, b2_ref, w3_ref, b3_ref, o_ref):
    # Layer 1: Linear(state_dim, 256) + ReLU  (bf16 MXU matmul, f32 accumulate)
    x = x_ref[...].astype(jnp.bfloat16)
    h1 = jnp.dot(x, w1_ref[...], preferred_element_type=jnp.float32) + b1_ref[...]
    h1 = jnp.maximum(h1, 0.0)

    # Layer 2: Linear(256, 256) + ReLU  (bf16 MXU matmul, f32 accumulate)
    h2 = jnp.dot(h1.astype(jnp.bfloat16), w2_ref[...],
                 preferred_element_type=jnp.float32) + b2_ref[...]
    h2 = jnp.maximum(h2, 0.0)

    # Layer 3: Linear(256, 1) as VPU multiply + XLU row-reduce (skip the MXU:
    # a 1-column matmul would use 1/256 of the MXU and still pay full latency).
    out = jnp.sum(h2 * w3_ref[...], axis=-1, keepdims=True) + b3_ref[0]
    o_ref[...] = out.astype(o_ref.dtype)


def value_net_forward(state, params, *, tile_b=256):
    """Run the ValueNet forward pass as a batch-tiled Pallas kernel.

    state:  (B, state_dim) float32
    params: dict with w1 (state_dim,256) bf16, b1 (1,256) f32,
                      w2 (256,256) bf16,       b2 (1,256) f32,
                      w3_row (1,256) f32,      b3 (1,) f32
    returns (B, 1) float32
    """
    B, state_dim = state.shape

    # TILE_B: multiple of 8 (f32 sublane); default 256 matches the v6e/v7x MXU
    # row dim.  Shrink for tiny smoke-test batches so we don't pad 8 -> 256.
    tile_b = min(tile_b, _round_up(B, 8))
    B_pad = _round_up(B, tile_b)
    if B_pad != B:
        state = jnp.pad(state, ((0, B_pad - B), (0, 0)))
    grid = (B_pad // tile_b,)

    flops = 2 * B_pad * (state_dim * HIDDEN + HIDDEN * HIDDEN + HIDDEN)
    bytes_accessed = (
        B_pad * state_dim * 4                       # state in (f32)
        + B_pad * 4                                 # output (f32)
        + (state_dim * HIDDEN + HIDDEN * HIDDEN) * 2  # bf16 weights
        + (2 * HIDDEN + HIDDEN + 1) * 4             # biases + w3 row (f32)
    )

    def resident(shape):
        # Weight / bias tiles: same block every grid step -> stay in VMEM.
        return pl.BlockSpec(shape, lambda i: (0, 0))

    out = pl.pallas_call(
        valuenet_kernel,
        out_shape=jax.ShapeDtypeStruct((B_pad, 1), jnp.float32),
        grid=grid,
        in_specs=[
            pl.BlockSpec((tile_b, state_dim), lambda i: (i, 0)),   # state tile
            resident((state_dim, HIDDEN)),                         # w1
            resident((1, HIDDEN)),                                 # b1
            resident((HIDDEN, HIDDEN)),                            # w2
            resident((1, HIDDEN)),                                 # b2
            resident((1, HIDDEN)),                                 # w3 row
            pl.BlockSpec(memory_space=pltpu.MemorySpace.SMEM),     # b3 scalar
        ],
        out_specs=pl.BlockSpec((tile_b, 1), lambda i: (i, 0)),
        compiler_params=pltpu.CompilerParams(
            dimension_semantics=("parallel",),  # shard batch over TCs on v7x
        ),
        cost_estimate=pl.CostEstimate(
            flops=flops, transcendentals=0, bytes_accessed=bytes_accessed),
    )(
        state,
        params["w1"], params["b1"],
        params["w2"], params["b2"],
        params["w3_row"], params["b3"],
    )
    return out[:B]


def init_params(key, state_dim, hidden=HIDDEN):
    """Deterministic init mimicking PyTorch Linear's U(-1/sqrt(fan_in), 1/sqrt(fan_in))."""
    ks = jax.random.split(key, 6)

    def linear(kw, kb, fan_in, fan_out):
        bound = 1.0 / jnp.sqrt(jnp.float32(fan_in))
        # stored as (in, out): y = x @ W + b
        w = jax.random.uniform(kw, (fan_in, fan_out), jnp.float32, -bound, bound)
        b = jax.random.uniform(kb, (1, fan_out), jnp.float32, -bound, bound)
        return w, b

    w1, b1 = linear(ks[0], ks[1], state_dim, hidden)
    w2, b2 = linear(ks[2], ks[3], hidden, hidden)
    w3, b3 = linear(ks[4], ks[5], hidden, 1)
    return {
        "w1": w1.astype(jnp.bfloat16), "b1": b1,
        "w2": w2.astype(jnp.bfloat16), "b2": b2,
        "w3_row": w3.T,                   # (1, hidden) f32 row for the VPU path
        "b3": b3.reshape((1,)),           # (1,) f32 scalar for SMEM
    }


def value_net_reference(state, params):
    """Pure-JAX reference mirroring the kernel's bf16-compute / f32-accumulate math."""
    x = state.astype(jnp.bfloat16)
    h1 = jnp.maximum(
        jnp.dot(x, params["w1"], preferred_element_type=jnp.float32) + params["b1"], 0.0)
    h2 = jnp.maximum(
        jnp.dot(h1.astype(jnp.bfloat16), params["w2"],
                preferred_element_type=jnp.float32) + params["b2"], 0.0)
    return jnp.sum(h2 * params["w3_row"], axis=-1, keepdims=True) + params["b3"]


if __name__ == "__main__":
    key = jax.random.PRNGKey(0)
    k_params, k_state = jax.random.split(key)

    batch = 8
    state_dim = 32

    params = init_params(k_params, state_dim)
    state = jax.random.normal(k_state, (batch, state_dim), dtype=jnp.float32)

    out = value_net_forward(state, params)
    out = jax.block_until_ready(out)

    ref = value_net_reference(state, params)
    assert out.shape == (batch, 1), out.shape
    assert jnp.allclose(out, ref, atol=1e-3, rtol=1e-3), (
        f"max abs err = {jnp.max(jnp.abs(out - ref))}"
    )

    print("KERNEL_OK")
</pallas_src>

<mosaic_0001>
module attributes {stable_mosaic.version = 11 : i64} {
  func.func @valuenet_kernel(%arg0: i32, %arg1: memref<8x32xf32, #tpu.memory_space<vmem>>, %arg2: memref<32x256xbf16, #tpu.memory_space<vmem>>, %arg3: memref<1x256xf32, #tpu.memory_space<vmem>>, %arg4: memref<256x256xbf16, #tpu.memory_space<vmem>>, %arg5: memref<1x256xf32, #tpu.memory_space<vmem>>, %arg6: memref<1x256xf32, #tpu.memory_space<vmem>>, %arg7: memref<1xf32, #tpu.memory_space<smem>>, %arg8: memref<8x1xf32, #tpu.memory_space<vmem>>) attributes {dimension_semantics = [#tpu.dimension_semantics<parallel>], iteration_bounds = array<i64: 1>, scalar_prefetch = 0 : i64, scratch_operands = 0 : i64, tpu.core_type = #tpu.core_type<tc>, window_params = [{transform_indices = @transform_0, window_bounds = array<i64: 8, 32>}, {pipeline_mode = #tpu.pipeline_mode<synchronous>, transform_indices = @transform_1, window_bounds = array<i64: 32, 256>}, {pipeline_mode = #tpu.pipeline_mode<synchronous>, transform_indices = @transform_2, window_bounds = array<i64: 1, 256>}, {pipeline_mode = #tpu.pipeline_mode<synchronous>, transform_indices = @transform_3, window_bounds = array<i64: 256, 256>}, {pipeline_mode = #tpu.pipeline_mode<synchronous>, transform_indices = @transform_4, window_bounds = array<i64: 1, 256>}, {pipeline_mode = #tpu.pipeline_mode<synchronous>, transform_indices = @transform_5, window_bounds = array<i64: 1, 256>}, {transform_indices = @transform_6, window_bounds = array<i64: 1>}, {transform_indices = @transform_7, window_bounds = array<i64: 8, 1>}]} {
    %c0 = arith.constant 0 : index
    %c0_0 = arith.constant 0 : index
    %0 = vector.load %arg1[%c0, %c0_0] : memref<8x32xf32, #tpu.memory_space<vmem>>, vector<8x32xf32>
    %1 = arith.truncf %0 : vector<8x32xf32> to vector<8x32xbf16>
    %c0_1 = arith.constant 0 : index
    %c0_2 = arith.constant 0 : index
    %2 = vector.load %arg2[%c0_1, %c0_2] : memref<32x256xbf16, #tpu.memory_space<vmem>>, vector<32x256xbf16>
    %cst = arith.constant dense<0.000000e+00> : vector<8x256xf32>
    %3 = tpu.matmul %1, %2, %cst {dimension_numbers = #tpu.dot_dimension_numbers<[1], [0], [0], [1], [0, 0, 1, 1], [], []>} : vector<8x32xbf16>, vector<32x256xbf16>, vector<8x256xf32> -> vector<8x256xf32>
    %c0_3 = arith.constant 0 : index
    %c0_4 = arith.constant 0 : index
    %4 = vector.load %arg3[%c0_3, %c0_4] : memref<1x256xf32, #tpu.memory_space<vmem>>, vector<1x256xf32>
    %5 = vector.broadcast %4 : vector<1x256xf32> to vector<8x256xf32>
    %6 = arith.addf %3, %5 : vector<8x256xf32>
    %cst_5 = arith.constant 0.000000e+00 : f32
    %7 = vector.broadcast %cst_5 : f32 to vector<8x256xf32>
    %8 = arith.maximumf %6, %7 : vector<8x256xf32>
    %9 = arith.truncf %8 : vector<8x256xf32> to vector<8x256xbf16>
    %c0_6 = arith.constant 0 : index
    %c0_7 = arith.constant 0 : index
    %10 = vector.load %arg4[%c0_6, %c0_7] : memref<256x256xbf16, #tpu.memory_space<vmem>>, vector<256x256xbf16>
    %cst_8 = arith.constant dense<0.000000e+00> : vector<8x256xf32>
    %11 = tpu.matmul %9, %10, %cst_8 {dimension_numbers = #tpu.dot_dimension_numbers<[1], [0], [0], [1], [0, 0, 1, 1], [], []>} : vector<8x256xbf16>, vector<256x256xbf16>, vector<8x256xf32> -> vector<8x256xf32>
    %c0_9 = arith.constant 0 : index
    %c0_10 = arith.constant 0 : index
    %12 = vector.load %arg5[%c0_9, %c0_10] : memref<1x256xf32, #tpu.memory_space<vmem>>, vector<1x256xf32>
    %13 = vector.broadcast %12 : vector<1x256xf32> to vector<8x256xf32>
    %14 = arith.addf %11, %13 : vector<8x256xf32>
    %cst_11 = arith.constant 0.000000e+00 : f32
    %15 = vector.broadcast %cst_11 : f32 to vector<8x256xf32>
    %16 = arith.maximumf %14, %15 : vector<8x256xf32>
    %c0_12 = arith.constant 0 : index
    %c0_13 = arith.constant 0 : index
    %17 = vector.load %arg6[%c0_12, %c0_13] : memref<1x256xf32, #tpu.memory_space<vmem>>, vector<1x256xf32>
    %18 = vector.broadcast %17 : vector<1x256xf32> to vector<8x256xf32>
    %19 = arith.mulf %16, %18 : vector<8x256xf32>
    %cst_14 = arith.constant dense<0.000000e+00> : vector<8xf32>
    %20 = vector.multi_reduction <add>, %19, %cst_14 [1] : vector<8x256xf32> to vector<8xf32>
    %21 = vector.shape_cast %20 : vector<8xf32> to vector<8x1xf32>
    %c0_15 = arith.constant 0 : index
    %22 = memref.load %arg7[%c0_15] : memref<1xf32, #tpu.memory_space<smem>>
    %23 = vector.broadcast %22 : f32 to vector<8x1xf32>
    %24 = arith.addf %21, %23 : vector<8x1xf32>
    %c0_16 = arith.constant 0 : index
    %c0_17 = arith.constant 0 : index
    %25 = vector.load %arg8[%c0_16, %c0_17] : memref<8x1xf32, #tpu.memory_space<vmem>>, vector<8x1xf32>
    tpu.vector_store %arg8[%c0_16, %c0_17], %24 {strides = array<i32>} : memref<8x1xf32, #tpu.memory_space<vmem>>, vector<8x1xf32>,
    return
  }
  func.func @transform_0(%arg0: i32) -> (i32, i32) {
    %c0_i32 = arith.constant 0 : i32
    %c0_i32_0 = arith.constant 0 : i32
    return %arg0, %c0_i32 : i32, i32
  }
  func.func @transform_1(%arg0: i32) -> (i32, i32) {
    %c0_i32 = arith.constant 0 : i32
    %c0_i32_0 = arith.constant 0 : i32
    %c0_i32_1 = arith.constant 0 : i32
    return %c0_i32, %c0_i32_0 : i32, i32
  }
  func.func @transform_2(%arg0: i32) -> (i32, i32) {
    %c0_i32 = arith.constant 0 : i32
    %c0_i32_0 = arith.constant 0 : i32
    %c0_i32_1 = arith.constant 0 : i32
    return %c0_i32, %c0_i32_0 : i32, i32
  }
  func.func @transform_3(%arg0: i32) -> (i32, i32) {
    %c0_i32 = arith.constant 0 : i32
    %c0_i32_0 = arith.constant 0 : i32
    %c0_i32_1 = arith.constant 0 : i32
    return %c0_i32, %c0_i32_0 : i32, i32
  }
  func.func @transform_4(%arg0: i32) -> (i32, i32) {
    %c0_i32 = arith.constant 0 : i32
    %c0_i32_0 = arith.constant 0 : i32
    %c0_i32_1 = arith.constant 0 : i32
    return %c0_i32, %c0_i32_0 : i32, i32
  }
  func.func @transform_5(%arg0: i32) -> (i32, i32) {
    %c0_i32 = arith.constant 0 : i32
    %c0_i32_0 = arith.constant 0 : i32
    %c0_i32_1 = arith.constant 0 : i32
    return %c0_i32, %c0_i32_0 : i32, i32
  }
  func.func @transform_6(%arg0: i32) -> i32 {
    %c0_i32 = arith.constant 0 : i32
    %c0_i32_0 = arith.constant 0 : i32
    return %c0_i32 : i32
  }
  func.func @transform_7(%arg0: i32) -> (i32, i32) {
    %c0_i32 = arith.constant 0 : i32
    %c0_i32_0 = arith.constant 0 : i32
    return %arg0, %c0_i32 : i32, i32
  }
}

</mosaic_0001>

<llo_original>
// kernel: tpu_custom_call.1
$region0: #{tpu_custom_call.1}
  #allocation0 [shape = 'u32[]', space=smem, size = 0x4, offset = 0x4, fixed_abs, tag = 'smem constant byte address 0x4 - core index']
  #allocation1 [shape = 'u32[144,128]{1,0:T(1,128)}', space=vmem, size = 0x12000, scoped, tag = 'internal scratch']
  #allocation2 [shape = 'f32[1]{0:T(128)S(6)}', space=smem, size = 0x200, scoped, tag = 'scoped memory for tpu_custom_call.1']
  %s0 = inlined_call_operand.hbm [shape: f32[8,32], index: 0, kind: input, shape index: {}]
  %s1 = inlined_call_operand.hbm [shape: bf16[32,256], index: 1, kind: input, shape index: {}]
  %s2 = inlined_call_operand.vmem [shape: f32[1,256], index: 2, kind: input, shape index: {}]
  %s3 = inlined_call_operand.hbm [shape: bf16[256,256], index: 3, kind: input, shape index: {}]
  %s4 = inlined_call_operand.vmem [shape: f32[1,256], index: 4, kind: input, shape index: {}]
  %s5 = inlined_call_operand.vmem [shape: f32[1,256], index: 5, kind: input, shape index: {}]
  %s6 = inlined_call_operand.<no memory space> [shape: f32[1], index: 6, kind: input, shape index: {}]
  %s7 = inlined_call_operand.vmem [shape: f32[8,1], index: 7, kind: output, shape index: {}]
  %s8 = sld [smem:[#allocation0]]
  $region50: #{tpu_custom_call.1} parent=0
    _
  %s10 = ssub.s32 1, %s8
  %s11 = scalar_select 0, %s10, %s8
  %12 = sst [smem:[#allocation2]] %s6
  $region1: #{tpu_custom_call.1} parent=0
    #allocation3 [shape = 'u8[4096]{0}', space=vmem, size = 0x1000, scoped, tag = 'input window, operand 0, single buffered']
    #allocation4 [shape = 's32[1]{0}', space=sflag, size = 0x4, scoped, tag = 'scoped memory for tpu_custom_call.1']
    #allocation5 [shape = 'u8[16384]{0}', space=vmem, size = 0x4000, scoped, tag = 'input window, operand 1, single buffered']
    #allocation6 [shape = 's32[1]{0}', space=sflag, size = 0x4, scoped, tag = 'scoped memory for tpu_custom_call.1']
    #allocation7 [shape = 'u8[131072]{0}', space=vmem, size = 0x20000, scoped, tag = 'input window, operand 3, single buffered']
    %13 = vsyncpa [#allocation4], 0
    %14 = vsyncpa [#allocation6], 0
    // Predicated region
    $region2: #{tpu_custom_call.1} parent=1 // pred_check
      _
    $region3: #{tpu_custom_call.1} parent=1 // pred_check_branch
      %16 = sbr.rel (0) target = $region5
    $region4: #{tpu_custom_call.1} parent=1 // pred_region
      %s18 = ssub.s32 128, 128
      %19 = vsyncadd [#allocation4], %s18
      %s21 = sshll.u32 [#allocation3], 4
      %s22 = int_to_ptr.vmem [resolvable:$true] %s21
      %24 = dma.hbm_to_vmem [thread:$0]  %s0, 128, %s22, [#allocation4]
    $region5: #{tpu_custom_call.1} parent=1 // pred_fallthru
      _
    // Predicated region
    $region6: #{tpu_custom_call.1} parent=1 // pred_check
      _
    $region7: #{tpu_custom_call.1} parent=1 // pred_check_branch
      %26 = sbr.rel (0) target = $region9
    $region8: #{tpu_custom_call.1} parent=1 // pred_region
      %s28 = ssub.s32 512, 512
      %29 = vsyncadd [#allocation6], %s28
      %s30 = sshll.u32 [#allocation5], 4
      %s31 = int_to_ptr.vmem [resolvable:$true] %s30
      %36 = dma.hbm_to_vmem [thread:$0]  %s1, 512, %s31, [#allocation6], 128, 128, 8
    $region9: #{tpu_custom_call.1} parent=1 // pred_fallthru
      _
    // Predicated region
    $region10: #{tpu_custom_call.1} parent=1 // pred_check
      _
    $region11: #{tpu_custom_call.1} parent=1 // pred_check_branch
      %38 = sbr.rel (0) target = $region13
    $region12: #{tpu_custom_call.1} parent=1 // pred_region
      _
    $region13: #{tpu_custom_call.1} parent=1 // pred_fallthru
      _
    // Predicated region
    $region14: #{tpu_custom_call.1} parent=1 // pred_check
      _
    $region15: #{tpu_custom_call.1} parent=1 // pred_check_branch
      %40 = sbr.rel (0) target = $region17
    $region16: #{tpu_custom_call.1} parent=1 // pred_region
      %s42 = ssub.s32 4096, 4096
      %43 = vsyncadd [#allocation6], %s42
      %s44 = sshll.u32 [#allocation7], 4
      %s45 = int_to_ptr.vmem [resolvable:$true] %s44
      %50 = dma.hbm_to_vmem [thread:$0]  %s3, 4096, %s45, [#allocation6], 128, 128, 8
    $region17: #{tpu_custom_call.1} parent=1 // pred_fallthru
      _
    // Predicated region
    $region18: #{tpu_custom_call.1} parent=1 // pred_check
      _
    $region19: #{tpu_custom_call.1} parent=1 // pred_check_branch
      %52 = sbr.rel (0) target = $region21
    $region20: #{tpu_custom_call.1} parent=1 // pred_region
      _
    $region21: #{tpu_custom_call.1} parent=1 // pred_fallthru
      _
    // Predicated region
    $region22: #{tpu_custom_call.1} parent=1 // pred_check
      _
    $region23: #{tpu_custom_call.1} parent=1 // pred_check_branch
      %54 = sbr.rel (0) target = $region25
    $region24: #{tpu_custom_call.1} parent=1 // pred_region
      _
    $region25: #{tpu_custom_call.1} parent=1 // pred_fallthru
      _
    // Predicated region
    $region26: #{tpu_custom_call.1} parent=1 // pred_check
      _
    $region27: #{tpu_custom_call.1} parent=1 // pred_check_branch
      %56 = sbr.rel (0) target = $region29
    $region28: #{tpu_custom_call.1} parent=1 // pred_region
      _
    $region29: #{tpu_custom_call.1} parent=1 // pred_fallthru
      _
    // Predicated region
    $region30: #{tpu_custom_call.1} parent=1 // pred_check
      _
    $region31: #{tpu_custom_call.1} parent=1 // pred_check_branch
      %58 = sbr.rel (0) target = $region33
    $region32: #{tpu_custom_call.1} parent=1 // pred_region
      %59 = dma.done [#allocation4], 128
    $region33: #{tpu_custom_call.1} parent=1 // pred_fallthru
      _
    // Predicated region
    $region34: #{tpu_custom_call.1} parent=1 // pred_check
      _
    $region35: #{tpu_custom_call.1} parent=1 // pred_check_branch
      %61 = sbr.rel (0) target = $region37
    $region36: #{tpu_custom_call.1} parent=1 // pred_region
      %62 = dma.done [#allocation6], 512
    $region37: #{tpu_custom_call.1} parent=1 // pred_fallthru
      _
    // Predicated region
    $region38: #{tpu_custom_call.1} parent=1 // pred_check
      _
    $region39: #{tpu_custom_call.1} parent=1 // pred_check_branch
      %64 = sbr.rel (0) target = $region41
    $region40: #{tpu_custom_call.1} parent=1 // pred_region
      %65 = dma.done [#allocation6], 4096
    $region41: #{tpu_custom_call.1} parent=1 // pred_fallthru
      _
    %v67 = vld [vmem:[#allocation3] sm:$0xff]
    %v68 = vpack.c.bf16 %v67, %v67
    %v69 = vld [vmem:[#allocation5] sm:$0xff]
    %v70 = vld [vmem:[#allocation5 + $0x8] sm:$0xff]
    %v71 = vld [vmem:[#allocation5 + $0x10] sm:$0xff]
    %v72 = vld [vmem:[#allocation5 + $0x18] sm:$0xff]
    %v73 = vld [vmem:[%s2] sm:$0x3]
    %v75 = vlaneseq
    %v76 = vshrl.u32 %v75, 7
    %v77 = vsub.s32 0, %v76
    %v78 = vrot.slane %v73, %v77
    %v79 = vlaneseq
    %v80 = vshrl.u32 %v79, 7
    %v81 = vsub.s32 1, %v80
    %v82 = vrot.slane %v73, %v81
    %v89 = vunpack.c.l.b16 %v69
    %v90 = vunpack.c.h.b16 %v69
    %v91 = vunpack.c.l.b16 %v70
    %v92 = vunpack.c.h.b16 %v70
    %v93 = vunpack.c.l.b16 %v71
    %v94 = vunpack.c.h.b16 %v71
    %v95 = vunpack.c.l.b16 %v72
    %v96 = vunpack.c.h.b16 %v72
    %v97 = vpack.c.b16 %v91, %v89
    %v98 = vpack.c.b16 %v92, %v90
    %v99 = vpack.c.b16 %v95, %v93
    %v100 = vpack.c.b16 %v96, %v94
    %vm105 = vcmask 261120
    %v107 = vsel %vm105, %v68, 0
    %109 = vmatprep.subr.bf16.mxu0 %v98
    %110 = vmatpush1.bf16.msra.mxu0 %v97
    %111 = vmatprep.subr.bf16.mxu0 %v100
    %112 = vmatpush1.bf16.msra.mxu0 %v99
    %113 = vmatprep.subr.bf16.mxu0 0
    %114 = vmatpush1.bf16.msra.mxu0 0
    %115 = vmatprep.subr.bf16.mxu0 0
    %116 = vmatpush1.bf16.msra.mxu0 0
    %117 = vmatprep.subr.bf16.mxu0 0
    %118 = vmatpush1.bf16.msra.mxu0 0
    %119 = vmatprep.subr.bf16.mxu0 0
    %120 = vmatpush1.bf16.msra.mxu0 0
    %121 = vmatprep.subr.bf16.mxu0 0
    %122 = vmatpush1.bf16.msra.mxu0 0
    %123 = vmatprep.subr.bf16.mxu0 0
    %124 = vmatpush1.bf16.msra.mxu0 0
    %125 = vmatprep.subr.bf16.mxu0 0
    %126 = vmatpush1.bf16.msra.mxu0 0
    %127 = vmatprep.subr.bf16.mxu0 0
    %128 = vmatpush1.bf16.msra.mxu0 0
    %129 = vmatprep.subr.bf16.mxu0 0
    %130 = vmatpush1.bf16.msra.mxu0 0
    %131 = vmatprep.subr.bf16.mxu0 0
    %132 = vmatpush1.bf16.msra.mxu0 0
    %133 = vmatprep.subr.bf16.mxu0 0
    %134 = vmatpush1.bf16.msra.mxu0 0
    %135 = vmatprep.subr.bf16.mxu0 0
    %136 = vmatpush1.bf16.msra.mxu0 0
    %137 = vmatprep.subr.bf16.mxu0 0
    %138 = vmatpush1.bf16.msra.mxu0 0
    %139 = vmatprep.subr.bf16.mxu0 0
    %140 = vmatpush1.bf16.msra.mxu0 0
    %141 = vmatprep.mubr.bf16.mxu0 0
    %142 = vmatmul.mubr.bf16.gmra.mrb[0].mxu0 %v107
    %v143 = vpop.f32.mrb[0].mxu0
    %v144 = vadd.f32 %v78, %v143
    %v145 = vpop.f32.mrb[0].mxu0
    %v146 = vadd.f32 %v82, %v145
    %v147 = vpop.f32.mrb[0].mxu0
    %v148 = vpop.f32.mrb[0].mxu0
    %149 = vdwg.mxu0
    %v150 = vmax.f32 %v144, 0.0
    %v151 = vmax.f32 %v146, 0.0
    %v152 = vpack.c.bf16 %v150, %v150
    %v153 = vpack.c.bf16 %v151, %v151
    %v154 = vld [vmem:[#allocation7] sm:$0xff]
    %v155 = vld [vmem:[#allocation7 + $0x8] sm:$0xff]
    %v156 = vld [vmem:[#allocation7 + $0x10] sm:$0xff]
    %v157 = vld [vmem:[#allocation7 + $0x18] sm:$0xff]
    %v158 = vld [vmem:[#allocation7 + $0x20] sm:$0xff]
    %v159 = vld [vmem:[#allocation7 + $0x28] sm:$0xff]
    %v160 = vld [vmem:[#allocation7 + $0x30] sm:$0xff]
    %v161 = vld [vmem:[#allocation7 + $0x38] sm:$0xff]
    %v162 = vld [vmem:[#allocation7 + $0x40] sm:$0xff]
    %v163 = vld [vmem:[#allocation7 + $0x48] sm:$0xff]
    %v164 = vld [vmem:[#allocation7 + $0x50] sm:$0xff]
    %v165 = vld [vmem:[#allocation7 + $0x58] sm:$0xff]
    %v166 = vld [vmem:[#allocation7 + $0x60] sm:$0xff]
    %v167 = vld [vmem:[#allocation7 + $0x68] sm:$0xff]
    %v168 = vld [vmem:[#allocation7 + $0x70] sm:$0xff]
    %v169 = vld [vmem:[#allocation7 + $0x78] sm:$0xff]
    %v170 = vld [vmem:[#allocation7 + $0x80] sm:$0xff]
    %v171 = vld [vmem:[#allocation7 + $0x88] sm:$0xff]
    %v172 = vld [vmem:[#allocation7 + $0x90] sm:$0xff]
    %v173 = vld [vmem:[#allocation7 + $0x98] sm:$0xff]
    %v174 = vld [vmem:[#allocation7 + $0xa0] sm:$0xff]
    %v175 = vld [vmem:[#allocation7 + $0xa8] sm:$0xff]
    %v176 = vld [vmem:[#allocation7 + $0xb0] sm:$0xff]
    %v177 = vld [vmem:[#allocation7 + $0xb8] sm:$0xff]
    %v178 = vld [vmem:[#allocation7 + $0xc0] sm:$0xff]
    %v179 = vld [vmem:[#allocation7 + $0xc8] sm:$0xff]
    %v180 = vld [vmem:[#allocation7 + $0xd0] sm:$0xff]
    %v181 = vld [vmem:[#allocation7 + $0xd8] sm:$0xff]
    %v182 = vld [vmem:[#allocation7 + $0xe0] sm:$0xff]
    %v183 = vld [vmem:[#allocation7 + $0xe8] sm:$0xff]
    %v184 = vld [vmem:[#allocation7 + $0xf0] sm:$0xff]
    %v185 = vld [vmem:[#allocation7 + $0xf8] sm:$0xff]
    %v186 = vld [vmem:[%s4] sm:$0x3]
    %v188 = vlaneseq
    %v189 = vshrl.u32 %v188, 7
    %v190 = vsub.s32 0, %v189
    %v191 = vrot.slane %v186, %v190
    %v192 = vlaneseq
    %v193 = vshrl.u32 %v192, 7
    %v194 = vsub.s32 1, %v193
    %v195 = vrot.slane %v186, %v194
    %v230 = vunpack.c.l.b16 %v154
    %v231 = vunpack.c.h.b16 %v154
    %v232 = vunpack.c.l.b16 %v155
    %v233 = vunpack.c.h.b16 %v155
    %v234 = vunpack.c.l.b16 %v156
    %v235 = vunpack.c.h.b16 %v156
    %v236 = vunpack.c.l.b16 %v157
    %v237 = vunpack.c.h.b16 %v157
    %v238 = vunpack.c.l.b16 %v158
    %v239 = vunpack.c.h.b16 %v158
    %v240 = vunpack.c.l.b16 %v159
    %v241 = vunpack.c.h.b16 %v159
    %v242 = vunpack.c.l.b16 %v160
    %v243 = vunpack.c.h.b16 %v160
    %v244 = vunpack.c.l.b16 %v161
    %v245 = vunpack.c.h.b16 %v161
    %v246 = vunpack.c.l.b16 %v162
    %v247 = vunpack.c.h.b16 %v162
    %v248 = vunpack.c.l.b16 %v163
    %v249 = vunpack.c.h.b16 %v163
    %v250 = vunpack.c.l.b16 %v164
    %v251 = vunpack.c.h.b16 %v164
    %v252 = vunpack.c.l.b16 %v165
    %v253 = vunpack.c.h.b16 %v165
    %v254 = vunpack.c.l.b16 %v166
    %v255 = vunpack.c.h.b16 %v166
    %v256 = vunpack.c.l.b16 %v167
    %v257 = vunpack.c.h.b16 %v167
    %v258 = vunpack.c.l.b16 %v168
    %v259 = vunpack.c.h.b16 %v168
    %v260 = vunpack.c.l.b16 %v169
    %v261 = vunpack.c.h.b16 %v169
    %v262 = vunpack.c.l.b16 %v170
    %v263 = vunpack.c.h.b16 %v170
    %v264 = vunpack.c.l.b16 %v171
    %v265 = vunpack.c.h.b16 %v171
    %v266 = vunpack.c.l.b16 %v172
    %v267 = vunpack.c.h.b16 %v172
    %v268 = vunpack.c.l.b16 %v173
    %v269 = vunpack.c.h.b16 %v173
    %v270 = vunpack.c.l.b16 %v174
    %v271 = vunpack.c.h.b16 %v174
    %v272 = vunpack.c.l.b16 %v175
    %v273 = vunpack.c.h.b16 %v175
    %v274 = vunpack.c.l.b16 %v176
    %v275 = vunpack.c.h.b16 %v176
    %v276 = vunpack.c.l.b16 %v177
    %v277 = vunpack.c.h.b16 %v177
    %v278 = vunpack.c.l.b16 %v178
    %v279 = vunpack.c.h.b16 %v178
    %v280 = vunpack.c.l.b16 %v179
    %v281 = vunpack.c.h.b16 %v179
    %v282 = vunpack.c.l.b16 %v180
    %v283 = vunpack.c.h.b16 %v180
    %v284 = vunpack.c.l.b16 %v181
    %v285 = vunpack.c.h.b16 %v181
    %v286 = vunpack.c.l.b16 %v182
    %v287 = vunpack.c.h.b16 %v182
    %v288 = vunpack.c.l.b16 %v183
    %v289 = vunpack.c.h.b16 %v183
    %v290 = vunpack.c.l.b16 %v184
    %v291 = vunpack.c.h.b16 %v184
    %v292 = vunpack.c.l.b16 %v185
    %v293 = vunpack.c.h.b16 %v185
    %v294 = vpack.c.b16 %v232, %v230
    %v295 = vpack.c.b16 %v233, %v231
    %v296 = vpack.c.b16 %v236, %v234
    %v297 = vpack.c.b16 %v237, %v235
    %v298 = vpack.c.b16 %v240, %v238
    %v299 = vpack.c.b16 %v241, %v239
    %v300 = vpack.c.b16 %v244, %v242
    %v301 = vpack.c.b16 %v245, %v243
    %v302 = vpack.c.b16 %v248, %v246
    %v303 = vpack.c.b16 %v249, %v247
    %v304 = vpack.c.b16 %v252, %v250
    %v305 = vpack.c.b16 %v253, %v251
    %v306 = vpack.c.b16 %v256, %v254
    %v307 = vpack.c.b16 %v257, %v255
    %v308 = vpack.c.b16 %v260, %v258
    %v309 = vpack.c.b16 %v261, %v259
    %v310 = vpack.c.b16 %v264, %v262
    %v311 = vpack.c.b16 %v265, %v263
    %v312 = vpack.c.b16 %v268, %v266
    %v313 = vpack.c.b16 %v269, %v267
    %v314 = vpack.c.b16 %v272, %v270
    %v315 = vpack.c.b16 %v273, %v271
    %v316 = vpack.c.b16 %v276, %v274
    %v317 = vpack.c.b16 %v277, %v275
    %v318 = vpack.c.b16 %v280, %v278
    %v319 = vpack.c.b16 %v281, %v279
    %v320 = vpack.c.b16 %v284, %v282
    %v321 = vpack.c.b16 %v285, %v283
    %v322 = vpack.c.b16 %v288, %v286
    %v323 = vpack.c.b16 %v289, %v287
    %v324 = vpack.c.b16 %v292, %v290
    %v325 = vpack.c.b16 %v293, %v291
    %358 = vmatprep.subr.bf16.mxu0 %v295
    %359 = vmatpush1.bf16.msra.mxu0 %v294
    %360 = vmatprep.subr.bf16.mxu0 %v297
    %361 = vmatpush1.bf16.msra.mxu0 %v296
    %362 = vmatprep.subr.bf16.mxu0 %v299
    %363 = vmatpush1.bf16.msra.mxu0 %v298
    %364 = vmatprep.subr.bf16.mxu0 %v301
    %365 = vmatpush1.bf16.msra.mxu0 %v300
    %366 = vmatprep.subr.bf16.mxu0 %v303
    %367 = vmatpush1.bf16.msra.mxu0 %v302
    %368 = vmatprep.subr.bf16.mxu0 %v305
    %369 = vmatpush1.bf16.msra.mxu0 %v304
    %370 = vmatprep.subr.bf16.mxu0 %v307
    %371 = vmatpush1.bf16.msra.mxu0 %v306
    %372 = vmatprep.subr.bf16.mxu0 %v309
    %373 = vmatpush1.bf16.msra.mxu0 %v308
    %374 = vmatprep.subr.bf16.mxu0 %v311
    %375 = vmatpush1.bf16.msra.mxu0 %v310
    %376 = vmatprep.subr.bf16.mxu0 %v313
    %377 = vmatpush1.bf16.msra.mxu0 %v312
    %378 = vmatprep.subr.bf16.mxu0 %v315
    %379 = vmatpush1.bf16.msra.mxu0 %v314
    %380 = vmatprep.subr.bf16.mxu0 %v317
    %381 = vmatpush1.bf16.msra.mxu0 %v316
    %382 = vmatprep.subr.bf16.mxu0 %v319
    %383 = vmatpush1.bf16.msra.mxu0 %v318
    %384 = vmatprep.subr.bf16.mxu0 %v321
    %385 = vmatpush1.bf16.msra.mxu0 %v320
    %386 = vmatprep.subr.bf16.mxu0 %v323
    %387 = vmatpush1.bf16.msra.mxu0 %v322
    %388 = vmatprep.subr.bf16.mxu0 %v325
    %389 = vmatpush1.bf16.msra.mxu0 %v324
    %390 = vmatprep.mubr.bf16.mxu0 %v153
    %391 = vmatmul.mubr.bf16.gmra.mrb[0].mxu0 %v152
    %v392 = vpop.f32.mrb[0].mxu0
    %v393 = vadd.f32 %v191, %v392
    %v394 = vpop.f32.mrb[0].mxu0
    %v395 = vadd.f32 %v195, %v394
    %v396 = vpop.f32.mrb[0].mxu0
    %v397 = vpop.f32.mrb[0].mxu0
    %398 = vdwg.mxu0
    %v399 = vmax.f32 %v393, 0.0
    %v400 = vmax.f32 %v395, 0.0
    %v401 = vld [vmem:[%s5] sm:$0x3]
    %v403 = vlaneseq
    %v404 = vshrl.u32 %v403, 7
    %v405 = vsub.s32 0, %v404
    %v406 = vrot.slane %v401, %v405
    %v407 = vlaneseq
    %v408 = vshrl.u32 %v407, 7
    %v409 = vsub.s32 1, %v408
    %v410 = vrot.slane %v401, %v409
    %v413 = vmul.f32 %v399, %v406
    %v414 = vmul.f32 %v400, %v410
    %v415 = vadd.f32 %v413, %v414
    %416 = vadd.xlane.f32.xlu0 %v415
    %v417 = vpop.xlane.xlu0 %416
    %s418 = sld [smem:[#allocation2]]
    %v419 = vstv %s418
    %v420 = vadd.f32 %v417, %v419
    %vm421 = vcmask 7168
    %422 = vst.msk [vmem:[%s7] sm:$0xff] %vm421, %v420
    // Predicated region
    $region42: #{tpu_custom_call.1} parent=1 // pred_check
      _
    $region43: #{tpu_custom_call.1} parent=1 // pred_check_branch
      %424 = sbr.rel (0) target = $region45
    $region44: #{tpu_custom_call.1} parent=1 // pred_region
      _
    $region45: #{tpu_custom_call.1} parent=1 // pred_fallthru
      _
    // Predicated region
    $region46: #{tpu_custom_call.1} parent=1 // pred_check
      _
    $region47: #{tpu_custom_call.1} parent=1 // pred_check_branch
      %426 = sbr.rel (0) target = $region49
    $region48: #{tpu_custom_call.1} parent=1 // pred_region
      _
    $region49: #{tpu_custom_call.1} parent=1 // pred_fallthru
      _
    %427 = vsyncpa [#allocation4], 1
    %428 = vsyncpa [#allocation6], 1

</llo_original>
